<compile_context>
chip_gen: v6e
topology: v6e:2x2x1
jax: 0.10.0
libtpu: 0.0.40
codegen_flags: <defaults>
</compile_context>

<pallas_src>
import numpy as np
import jax
import jax.numpy as jnp
from jax import lax
from jax.experimental import pallas as pl
from jax.experimental.pallas import tpu as pltpu

J, L = 2, 8
M = N = 28
K = 1 + L * J + (L ** 2) * J * (J - 1) // 2      # 81 scattering paths
H = W_SP = M // (2 ** J)                         # 7
HW = H * W_SP                                    # 49
KHW = K * HW                                     # 3969 contraction depth
O = 10                                           # classes
EPS = 1e-5
TB_MAX = 256                                     # batch rows per grid step


# -----------------------------------------------------------------------------
# Scattering2D frontend (plain JAX, deterministic Morlet-like filter bank).
# TODO(synk): kymatio's exact padded Morlet Scattering2D has no clean Pallas
# equivalent (complex 2-D FFTs); this faithful periodic FFT scattering frontend
# stays outside the kernel and dominates end-to-end runtime.
# -----------------------------------------------------------------------------
def make_scattering_filters(m, n, j_max=J, n_angles=L):
    ky = 2.0 * np.pi * np.fft.fftfreq(m)[:, None]     # (M, 1)
    kx = 2.0 * np.pi * np.fft.fftfreq(n)[None, :]     # (1, N)
    psis = []
    slant = 4.0 / n_angles
    for j in range(j_max):
        sigma = 0.8 * (2.0 ** j)
        xi = 3.0 * np.pi / 4.0 / (2.0 ** j)
        for l in range(n_angles):
            theta = np.pi * l / n_angles
            kxr = kx * np.cos(theta) + ky * np.sin(theta)
            kyr = -kx * np.sin(theta) + ky * np.cos(theta)
            gab = np.exp(-(sigma ** 2) * ((kxr - xi) ** 2 + (slant * kyr) ** 2) / 2.0)
            gab0 = np.exp(-(sigma ** 2) * (kxr ** 2 + (slant * kyr) ** 2) / 2.0)
            kappa = np.exp(-(sigma ** 2) * (xi ** 2) / 2.0)
            psis.append(gab - kappa * gab0)            # ~zero-mean band-pass
    sigma_phi = 0.8 * (2.0 ** j_max)
    phi = np.exp(-(sigma_phi ** 2) * (kx ** 2 + ky ** 2) / 2.0)
    return (jnp.asarray(np.stack(psis), dtype=jnp.float32),
            jnp.asarray(phi, dtype=jnp.float32))


def scattering2d_j2(x, psi_hat, phi_hat):
    """x: (B, C, 28, 28) float32 NCHW -> (B, C, 81, 7, 7) float32."""
    sub = 2 ** J
    X = jnp.fft.fft2(x)

    def low(u):  # low-pass + subsample by 2^J
        y = jnp.fft.ifft2(jnp.fft.fft2(u) * phi_hat).real
        return y[..., ::sub, ::sub]

    s0 = low(x)[:, :, None]                                             # (B,C,1,7,7)
    u1 = jnp.abs(jnp.fft.ifft2(X[:, :, None] * psi_hat))                # (B,C,16,28,28)
    s1 = low(u1)                                                        # (B,C,16,7,7)
    u1a_hat = jnp.fft.fft2(u1[:, :, :L])                                # j1 = 0 paths
    u2 = jnp.abs(jnp.fft.ifft2(u1a_hat[:, :, :, None] * psi_hat[L:]))   # (B,C,8,8,28,28)
    s2 = low(u2).reshape(u2.shape[0], u2.shape[1], L * L, H, W_SP)      # (B,C,64,7,7)
    return jnp.concatenate([s0, s1, s2], axis=2).astype(jnp.float32)


# -----------------------------------------------------------------------------
# Pallas kernel: BN-folded Linear over one batch tile.
#   x_ref:     (TB, KHW) bf16  activations, already centered by the batch mean
#   w_ref:     (O, KHW)  f32   Linear weight
#   scale_ref: (1, KHW)  f32   per-lane gamma*rsqrt(var+eps) (per channel, x49)
#   bias_ref:  (1, O)    f32   Linear bias with the BN beta term folded in
#   o_ref:     (TB, O)   f32   logits for this batch tile
# -----------------------------------------------------------------------------
def bn_linear_kernel(x_ref, w_ref, scale_ref, bias_ref, o_ref):
    # Fold the BN scale into the weight slab (tiny VPU multiply, hidden under
    # the activation DMA), then a single bf16 MXU matmul with f32 accumulation.
    w_fold = (w_ref[...] * scale_ref[...]).astype(jnp.bfloat16)       # (O, KHW)
    acc = lax.dot_general(x_ref[...], w_fold,
                          dimension_numbers=(((1,), (1,)), ((), ())),
                          preferred_element_type=jnp.float32)         # (TB, O)
    o_ref[...] = acc + bias_ref[...]


def prepare_params(params):
    """One-time (batch-independent) repack of the BN/Linear parameters."""
    w = params["w"]                                       # (O, K*HW) f32
    wsum = w.reshape(O, K, HW).sum(axis=2)                # (O, K) per-channel row sums
    bias_eff = params["b"] + wsum @ params["beta"]        # fold BN beta into the bias
    return {"w": w, "bias": bias_eff.reshape(1, O), "gamma": params["gamma"]}


def bn_linear_pallas(s_bkhw, packed):
    """s_bkhw: (B, K, 7, 7) f32 scattering output; returns logits (B, O)."""
    B = s_bkhw.shape[0]

    # --- BatchNorm2d training-mode statistics over the FULL batch, exact f32,
    #     outside the kernel (so batch tiling cannot change BN semantics). -----
    mean_k = jnp.mean(s_bkhw, axis=(0, 2, 3))                                   # (K,)
    var_k = jnp.mean((s_bkhw - mean_k[None, :, None, None]) ** 2, axis=(0, 2, 3))
    scale_k = packed["gamma"] * lax.rsqrt(var_k + EPS)                          # (K,)

    # Per-lane expansions in the Linear's flatten order (k-major, hw-minor).
    mean_lane = jnp.repeat(mean_k, HW)                                          # (KHW,)
    scale_lane = jnp.repeat(scale_k, HW).reshape(1, KHW)                        # (1, KHW)

    # Natural layout (no pad, no transpose): (B, K, H, W) -> (B, K*HW).
    # Center with the batch mean BEFORE the bf16 cast (fused elementwise, zero
    # extra HBM traffic) so the bf16 DMA carries well-conditioned values.
    x_c = (s_bkhw.reshape(B, KHW) - mean_lane[None, :]).astype(jnp.bfloat16)

    # Batch tiling: single tile for small B; 256-row "parallel" tiles otherwise
    # (bounds per-tile VMEM and lets v7x's two TensorCores split the batch).
    if B <= TB_MAX:
        TB, Bp = B, B
    else:
        TB = TB_MAX
        Bp = ((B + TB - 1) // TB) * TB
        x_c = jnp.pad(x_c, ((0, Bp - B), (0, 0)))      # zero rows: inert, sliced off

    out = pl.pallas_call(
        bn_linear_kernel,
        out_shape=jax.ShapeDtypeStruct((Bp, O), jnp.float32),
        grid=(Bp // TB,),
        in_specs=[
            pl.BlockSpec((TB, KHW), lambda t: (t, 0)),     # bf16 activation tile
            pl.BlockSpec((O, KHW), lambda t: (0, 0)),      # weights (resident)
            pl.BlockSpec((1, KHW), lambda t: (0, 0)),      # per-lane BN scale
            pl.BlockSpec((1, O), lambda t: (0, 0)),        # bias (+ folded beta)
        ],
        out_specs=pl.BlockSpec((TB, O), lambda t: (t, 0)),
        compiler_params=pltpu.CompilerParams(
            dimension_semantics=("parallel",)),
    )(x_c, packed["w"], scale_lane, packed["bias"])
    return out[:B]


def scatter_model_forward(x, packed, psi_hat, phi_hat):
    s = scattering2d_j2(x, psi_hat, phi_hat)          # (B, C=1, 81, 7, 7)
    s = s.reshape(x.shape[0], K, H, W_SP)             # fold C=1 -> (B, 81, 7, 7)
    return bn_linear_pallas(s, packed)


def reference_forward(x, params, psi_hat, phi_hat):
    s = scattering2d_j2(x, psi_hat, phi_hat).reshape(x.shape[0], K, H, W_SP)
    mean = s.mean(axis=(0, 2, 3), keepdims=True)
    var = ((s - mean) ** 2).mean(axis=(0, 2, 3), keepdims=True)
    xhat = (s - mean) * jax.lax.rsqrt(var + EPS)
    xhat = xhat * params["gamma"].reshape(1, K, 1, 1) + params["beta"].reshape(1, K, 1, 1)
    flat = xhat.reshape(x.shape[0], K * HW)
    return jnp.dot(flat, params["w"].T, precision=jax.lax.Precision.HIGHEST) + params["b"]


if __name__ == "__main__":
    key = jax.random.PRNGKey(0)
    kx_, kw_, kb_ = jax.random.split(key, 3)

    B, C = 2, 1
    x = jax.random.normal(kx_, (B, C, M, N), dtype=jnp.float32)   # NCHW input

    # Deterministic parameter init (BatchNorm2d(81) + Linear(3969, 10)).
    fan_in = K * HW
    bound = 1.0 / np.sqrt(fan_in)
    params = {
        "gamma": jnp.ones((K,), jnp.float32),
        "beta": jnp.zeros((K,), jnp.float32),
        "w": jax.random.uniform(kw_, (O, fan_in), jnp.float32, -bound, bound),
        "b": jax.random.uniform(kb_, (O,), jnp.float32, -bound, bound),
    }

    psi_hat, phi_hat = make_scattering_filters(M, N)
    packed = prepare_params(params)                   # one-time parameter repack

    fwd = jax.jit(scatter_model_forward)              # fuses stats/center/cast into
    out = fwd(x, packed, psi_hat, phi_hat)            # the scattering epilogue
    out = jax.block_until_ready(out)

    ref = jax.block_until_ready(reference_forward(x, params, psi_hat, phi_hat))
    assert out.shape == (B, O), out.shape
    np.testing.assert_allclose(np.asarray(out), np.asarray(ref), rtol=1e-2, atol=1e-2)

    print("KERNEL_OK")
</pallas_src>

<mosaic_0001>
module attributes {stable_mosaic.version = 11 : i64} {
  func.func @bn_linear_kernel(%arg0: i32, %arg1: memref<2x3969xbf16, #tpu.memory_space<vmem>>, %arg2: memref<10x3969xf32, #tpu.memory_space<vmem>>, %arg3: memref<1x3969xf32, #tpu.memory_space<vmem>>, %arg4: memref<1x10xf32, #tpu.memory_space<vmem>>, %arg5: memref<2x10xf32, #tpu.memory_space<vmem>>) attributes {dimension_semantics = [#tpu.dimension_semantics<parallel>], iteration_bounds = array<i64: 1>, scalar_prefetch = 0 : i64, scratch_operands = 0 : i64, tpu.core_type = #tpu.core_type<tc>, window_params = [{transform_indices = @transform_0, window_bounds = array<i64: 2, 3969>}, {pipeline_mode = #tpu.pipeline_mode<synchronous>, transform_indices = @transform_1, window_bounds = array<i64: 10, 3969>}, {pipeline_mode = #tpu.pipeline_mode<synchronous>, transform_indices = @transform_2, window_bounds = array<i64: 1, 3969>}, {pipeline_mode = #tpu.pipeline_mode<synchronous>, transform_indices = @transform_3, window_bounds = array<i64: 1, 10>}, {transform_indices = @transform_4, window_bounds = array<i64: 2, 10>}]} {
    %c0 = arith.constant 0 : index
    %c0_0 = arith.constant 0 : index
    %0 = vector.load %arg2[%c0, %c0_0] : memref<10x3969xf32, #tpu.memory_space<vmem>>, vector<10x3969xf32>
    %c0_1 = arith.constant 0 : index
    %c0_2 = arith.constant 0 : index
    %1 = vector.load %arg3[%c0_1, %c0_2] : memref<1x3969xf32, #tpu.memory_space<vmem>>, vector<1x3969xf32>
    %2 = vector.broadcast %1 : vector<1x3969xf32> to vector<10x3969xf32>
    %3 = arith.mulf %0, %2 : vector<10x3969xf32>
    %4 = arith.truncf %3 : vector<10x3969xf32> to vector<10x3969xbf16>
    %c0_3 = arith.constant 0 : index
    %c0_4 = arith.constant 0 : index
    %5 = vector.load %arg1[%c0_3, %c0_4] : memref<2x3969xbf16, #tpu.memory_space<vmem>>, vector<2x3969xbf16>
    %cst = arith.constant dense<0.000000e+00> : vector<2x10xf32>
    %6 = tpu.matmul %5, %4, %cst {dimension_numbers = #tpu.dot_dimension_numbers<[1], [1], [0], [0], [0, 0, 1, 0], [], []>} : vector<2x3969xbf16>, vector<10x3969xbf16>, vector<2x10xf32> -> vector<2x10xf32>
    %c0_5 = arith.constant 0 : index
    %c0_6 = arith.constant 0 : index
    %7 = vector.load %arg4[%c0_5, %c0_6] : memref<1x10xf32, #tpu.memory_space<vmem>>, vector<1x10xf32>
    %8 = vector.broadcast %7 : vector<1x10xf32> to vector<2x10xf32>
    %9 = arith.addf %6, %8 : vector<2x10xf32>
    %c0_7 = arith.constant 0 : index
    %c0_8 = arith.constant 0 : index
    %10 = vector.load %arg5[%c0_7, %c0_8] : memref<2x10xf32, #tpu.memory_space<vmem>>, vector<2x10xf32>
    tpu.vector_store %arg5[%c0_7, %c0_8], %9 {strides = array<i32>} : memref<2x10xf32, #tpu.memory_space<vmem>>, vector<2x10xf32>,
    return
  }
  func.func @transform_0(%arg0: i32) -> (i32, i32) {
    %c0_i32 = arith.constant 0 : i32
    %c0_i32_0 = arith.constant 0 : i32
    return %arg0, %c0_i32 : i32, i32
  }
  func.func @transform_1(%arg0: i32) -> (i32, i32) {
    %c0_i32 = arith.constant 0 : i32
    %c0_i32_0 = arith.constant 0 : i32
    %c0_i32_1 = arith.constant 0 : i32
    return %c0_i32, %c0_i32_0 : i32, i32
  }
  func.func @transform_2(%arg0: i32) -> (i32, i32) {
    %c0_i32 = arith.constant 0 : i32
    %c0_i32_0 = arith.constant 0 : i32
    %c0_i32_1 = arith.constant 0 : i32
    return %c0_i32, %c0_i32_0 : i32, i32
  }
  func.func @transform_3(%arg0: i32) -> (i32, i32) {
    %c0_i32 = arith.constant 0 : i32
    %c0_i32_0 = arith.constant 0 : i32
    %c0_i32_1 = arith.constant 0 : i32
    return %c0_i32, %c0_i32_0 : i32, i32
  }
  func.func @transform_4(%arg0: i32) -> (i32, i32) {
    %c0_i32 = arith.constant 0 : i32
    %c0_i32_0 = arith.constant 0 : i32
    return %arg0, %c0_i32 : i32, i32
  }
}

</mosaic_0001>

<llo_original>
// kernel: sub.13
$region0: #{sub.13}
  %s0 = inlined_call_operand.vmem [shape: f32[81,49], index: 0, kind: input, shape index: {}]
  %s1 = inlined_call_operand.vmem [shape: f32[3969], index: 1, kind: output, shape index: {}]
  %v2 = vld [vmem:[%s0] sm:$0x1]
  %vm3 = vcmask 400384
  %4 = vst.msk [vmem:[%s1] sm:$0x1] %vm3, %v2
  %s5 = scalar_lea.vmem %s0, 47
  %v6 = vld [vmem:[%s5] sm:$0x1]
  %s7 = scalar_lea.vmem %s0, 47
  %v8 = vld [vmem:[%s7] sm:$0x1]
  %vm9 = vcmask 7168
  %v10 = vsel %vm9, %v8, %v6
  %11 = vrot.lane.b32.xlu0 %v10, 127
  %v12 = vpop.permute.xlu0 %11
  %vm13 = vcmask 392192
  %s14 = scalar_lea.vmem %s1, 18
  %15 = vst.msk [vmem:[%s14] sm:$0x1] %vm13, %v12
  %vm16 = vcmask 1048568
  %s17 = scalar_lea.vmem %s1, 17
  %18 = vst.msk [vmem:[%s17] sm:$0x1] %vm16, %v12
  %s19 = scalar_lea.vmem %s0, 13
  %v20 = vld [vmem:[%s19] sm:$0x1]
  %s21 = scalar_lea.vmem %s0, 13
  %v22 = vld [vmem:[%s21] sm:$0x1]
  %vm23 = vcmask 23552
  %v24 = vsel %vm23, %v22, %v20
  %25 = vrot.lane.b32.xlu0 %v24, 125
  %v26 = vpop.permute.xlu0 %25
  %vm27 = vcmask 375808
  %s28 = scalar_lea.vmem %s1, 5
  %29 = vst.msk [vmem:[%s28] sm:$0x1] %vm27, %v26
  %vm30 = vcmask 1048552
  %s31 = scalar_lea.vmem %s1, 4
  %32 = vst.msk [vmem:[%s31] sm:$0x1] %vm30, %v26
  %s33 = scalar_lea.vmem %s0, 60
  %v34 = vld [vmem:[%s33] sm:$0x1]
  %s35 = scalar_lea.vmem %s0, 60
  %v36 = vld [vmem:[%s35] sm:$0x1]
  %vm37 = vcmask 31744
  %v38 = vsel %vm37, %v36, %v34
  %39 = vrot.lane.b32.xlu0 %v38, 124
  %v40 = vpop.permute.xlu0 %39
  %vm41 = vcmask 367616
  %s42 = scalar_lea.vmem %s1, 23
  %43 = vst.msk [vmem:[%s42] sm:$0x1] %vm41, %v40
  %vm44 = vcmask 1048544
  %s45 = scalar_lea.vmem %s1, 22
  %46 = vst.msk [vmem:[%s45] sm:$0x1] %vm44, %v40
  %s47 = scalar_lea.vmem %s0, 26
  %v48 = vld [vmem:[%s47] sm:$0x1]
  %s49 = scalar_lea.vmem %s0, 26
  %v50 = vld [vmem:[%s49] sm:$0x1]
  %vm51 = vcmask 48128
  %v52 = vsel %vm51, %v50, %v48
  %53 = vrot.lane.b32.xlu0 %v52, 122
  %v54 = vpop.permute.xlu0 %53
  %vm55 = vcmask 351232
  %s56 = scalar_lea.vmem %s1, 10
  %57 = vst.msk [vmem:[%s56] sm:$0x1] %vm55, %v54
  %vm58 = vcmask 1048528
  %s59 = scalar_lea.vmem %s1, 9
  %60 = vst.msk [vmem:[%s59] sm:$0x1] %vm58, %v54
  %s61 = scalar_lea.vmem %s0, 73
  %v62 = vld [vmem:[%s61] sm:$0x1]
  %s63 = scalar_lea.vmem %s0, 73
  %v64 = vld [vmem:[%s63] sm:$0x1]
  %vm65 = vcmask 56320
  %v66 = vsel %vm65, %v64, %v62
  %67 = vrot.lane.b32.xlu0 %v66, 121
  %v68 = vpop.permute.xlu0 %67
  %vm69 = vcmask 343040
  %s70 = scalar_lea.vmem %s1, 28
  %71 = vst.msk [vmem:[%s70] sm:$0x1] %vm69, %v68
  %vm72 = vcmask 1048520
  %s73 = scalar_lea.vmem %s1, 27
  %74 = vst.msk [vmem:[%s73] sm:$0x1] %vm72, %v68
  %s75 = scalar_lea.vmem %s0, 39
  %v76 = vld [vmem:[%s75] sm:$0x1]
  %s77 = scalar_lea.vmem %s0, 39
  %v78 = vld [vmem:[%s77] sm:$0x1]
  %vm79 = vcmask 72704
  %v80 = vsel %vm79, %v78, %v76
  %81 = vrot.lane.b32.xlu0 %v80, 119
  %v82 = vpop.permute.xlu0 %81
  %vm83 = vcmask 326656
  %s84 = scalar_lea.vmem %s1, 15
  %85 = vst.msk [vmem:[%s84] sm:$0x1] %vm83, %v82
  %vm86 = vcmask 1048504
  %s87 = scalar_lea.vmem %s1, 14
  %88 = vst.msk [vmem:[%s87] sm:$0x1] %vm86, %v82
  %s89 = scalar_lea.vmem %s0, 5
  %v90 = vld [vmem:[%s89] sm:$0x1]
  %s91 = scalar_lea.vmem %s0, 5
  %v92 = vld [vmem:[%s91] sm:$0x1]
  %vm93 = vcmask 89088
  %v94 = vsel %vm93, %v92, %v90
  %95 = vrot.lane.b32.xlu0 %v94, 117
  %v96 = vpop.permute.xlu0 %95
  %vm97 = vcmask 310272
  %s98 = scalar_lea.vmem %s1, 2
  %99 = vst.msk [vmem:[%s98] sm:$0x1] %vm97, %v96
  %vm100 = vcmask 1048488
  %s101 = scalar_lea.vmem %s1, 1
  %102 = vst.msk [vmem:[%s101] sm:$0x1] %vm100, %v96
  %s103 = scalar_lea.vmem %s0, 52
  %v104 = vld [vmem:[%s103] sm:$0x1]
  %s105 = scalar_lea.vmem %s0, 52
  %v106 = vld [vmem:[%s105] sm:$0x1]
  %vm107 = vcmask 97280
  %v108 = vsel %vm107, %v106, %v104
  %109 = vrot.lane.b32.xlu0 %v108, 116
  %v110 = vpop.permute.xlu0 %109
  %vm111 = vcmask 302080
  %s112 = scalar_lea.vmem %s1, 20
  %113 = vst.msk [vmem:[%s112] sm:$0x1] %vm111, %v110
  %vm114 = vcmask 1048480
  %s115 = scalar_lea.vmem %s1, 19
  %116 = vst.msk [vmem:[%s115] sm:$0x1] %vm114, %v110
  %s117 = scalar_lea.vmem %s0, 18
  %v118 = vld [vmem:[%s117] sm:$0x1]
  %s119 = scalar_lea.vmem %s0, 18
  %v120 = vld [vmem:[%s119] sm:$0x1]
  %vm121 = vcmask 113664
  %v122 = vsel %vm121, %v120, %v118
  %123 = vrot.lane.b32.xlu0 %v122, 114
  %v124 = vpop.permute.xlu0 %123
  %vm125 = vcmask 285696
  %s126 = scalar_lea.vmem %s1, 7
  %127 = vst.msk [vmem:[%s126] sm:$0x1] %vm125, %v124
  %vm128 = vcmask 1048464
  %s129 = scalar_lea.vmem %s1, 6
  %130 = vst.msk [vmem:[%s129] sm:$0x1] %vm128, %v124
  %s131 = scalar_lea.vmem %s0, 65
  %v132 = vld [vmem:[%s131] sm:$0x1]
  %s133 = scalar_lea.vmem %s0, 65
  %v134 = vld [vmem:[%s133] sm:$0x1]
  %vm135 = vcmask 121856
  %v136 = vsel %vm135, %v134, %v132
  %137 = vrot.lane.b32.xlu0 %v136, 113
  %v138 = vpop.permute.xlu0 %137
  %vm139 = vcmask 277504
  %s140 = scalar_lea.vmem %s1, 25
  %141 = vst.msk [vmem:[%s140] sm:$0x1] %vm139, %v138
  %vm142 = vcmask 1048456
  %s143 = scalar_lea.vmem %s1, 24
  %144 = vst.msk [vmem:[%s143] sm:$0x1] %vm142, %v138
  %s145 = scalar_lea.vmem %s0, 31
  %v146 = vld [vmem:[%s145] sm:$0x1]
  %s147 = scalar_lea.vmem %s0, 31
  %v148 = vld [vmem:[%s147] sm:$0x1]
  %vm149 = vcmask 138240
  %v150 = vsel %vm149, %v148, %v146
  %151 = vrot.lane.b32.xlu0 %v150, 111
  %v152 = vpop.permute.xlu0 %151
  %vm153 = vcmask 261120
  %s154 = scalar_lea.vmem %s1, 12
  %155 = vst.msk [vmem:[%s154] sm:$0x1] %vm153, %v152
  %vm156 = vcmask 1048440
  %s157 = scalar_lea.vmem %s1, 11
  %158 = vst.msk [vmem:[%s157] sm:$0x1] %vm156, %v152
  %s159 = scalar_lea.vmem %s0, 78
  %v160 = vld [vmem:[%s159] sm:$0x1]
  %s161 = scalar_lea.vmem %s0, 78
  %v162 = vld [vmem:[%s161] sm:$0x1]
  %vm163 = vcmask 146432
  %v164 = vsel %vm163, %v162, %v160
  %165 = vrot.lane.b32.xlu0 %v164, 110
  %v166 = vpop.permute.xlu0 %165
  %vm167 = vcmask 252928
  %s168 = scalar_lea.vmem %s1, 30
  %169 = vst.msk [vmem:[%s168] sm:$0x1] %vm167, %v166
  %vm170 = vcmask 1048432
  %s171 = scalar_lea.vmem %s1, 29
  %172 = vst.msk [vmem:[%s171] sm:$0x1] %vm170, %v166
  %s173 = scalar_lea.vmem %s0, 44
  %v174 = vld [vmem:[%s173] sm:$0x1]
  %s175 = scalar_lea.vmem %s0, 44
  %v176 = vld [vmem:[%s175] sm:$0x1]
  %vm177 = vcmask 162816
  %v178 = vsel %vm177, %v176, %v174
  %179 = vrot.lane.b32.xlu0 %v178, 108
  %v180 = vpop.permute.xlu0 %179
  %vm181 = vcmask 236544
  %s182 = scalar_lea.vmem %s1, 17
  %183 = vst.msk [vmem:[%s182] sm:$0x1] %vm181, %v180
  %vm184 = vcmask 1048416
  %s185 = scalar_lea.vmem %s1, 16
  %186 = vst.msk [vmem:[%s185] sm:$0x1] %vm184, %v180
  %s187 = scalar_lea.vmem %s0, 10
  %v188 = vld [vmem:[%s187] sm:$0x1]
  %s189 = scalar_lea.vmem %s0, 10
  %v190 = vld [vmem:[%s189] sm:$0x1]
  %vm191 = vcmask 179200
  %v192 = vsel %vm191, %v190, %v188
  %193 = vrot.lane.b32.xlu0 %v192, 106
  %v194 = vpop.permute.xlu0 %193
  %vm195 = vcmask 220160
  %s196 = scalar_lea.vmem %s1, 4
  %197 = vst.msk [vmem:[%s196] sm:$0x1] %vm195, %v194
  %vm198 = vcmask 1048400
  %s199 = scalar_lea.vmem %s1, 3
  %200 = vst.msk [vmem:[%s199] sm:$0x1] %vm198, %v194
  %s201 = scalar_lea.vmem %s0, 57
  %v202 = vld [vmem:[%s201] sm:$0x1]
  %s203 = scalar_lea.vmem %s0, 57
  %v204 = vld [vmem:[%s203] sm:$0x1]
  %vm205 = vcmask 187392
  %v206 = vsel %vm205, %v204, %v202
  %207 = vrot.lane.b32.xlu0 %v206, 105
  %v208 = vpop.permute.xlu0 %207
  %vm209 = vcmask 211968
  %s210 = scalar_lea.vmem %s1, 22
  %211 = vst.msk [vmem:[%s210] sm:$0x1] %vm209, %v208
  %vm212 = vcmask 1048392
  %s213 = scalar_lea.vmem %s1, 21
  %214 = vst.msk [vmem:[%s213] sm:$0x1] %vm212, %v208
  %s215 = scalar_lea.vmem %s0, 23
  %v216 = vld [vmem:[%s215] sm:$0x1]
  %s217 = scalar_lea.vmem %s0, 23
  %v218 = vld [vmem:[%s217] sm:$0x1]
  %vm219 = vcmask 203776
  %v220 = vsel %vm219, %v218, %v216
  %221 = vrot.lane.b32.xlu0 %v220, 103
  %v222 = vpop.permute.xlu0 %221
  %vm223 = vcmask 195584
  %s224 = scalar_lea.vmem %s1, 9
  %225 = vst.msk [vmem:[%s224] sm:$0x1] %vm223, %v222
  %vm226 = vcmask 1048376
  %s227 = scalar_lea.vmem %s1, 8
  %228 = vst.msk [vmem:[%s227] sm:$0x1] %vm226, %v222
  %s229 = scalar_lea.vmem %s0, 70
  %v230 = vld [vmem:[%s229] sm:$0x1]
  %s231 = scalar_lea.vmem %s0, 70
  %v232 = vld [vmem:[%s231] sm:$0x1]
  %vm233 = vcmask 211968
  %v234 = vsel %vm233, %v232, %v230
  %235 = vrot.lane.b32.xlu0 %v234, 102
  %v236 = vpop.permute.xlu0 %235
  %vm237 = vcmask 187392
  %s238 = scalar_lea.vmem %s1, 27
  %239 = vst.msk [vmem:[%s238] sm:$0x1] %vm237, %v236
  %vm240 = vcmask 1048368
  %s241 = scalar_lea.vmem %s1, 26
  %242 = vst.msk [vmem:[%s241] sm:$0x1] %vm240, %v236
  %s243 = scalar_lea.vmem %s0, 36
  %v244 = vld [vmem:[%s243] sm:$0x1]
  %s245 = scalar_lea.vmem %s0, 36
  %v246 = vld [vmem:[%s245] sm:$0x1]
  %vm247 = vcmask 228352
  %v248 = vsel %vm247, %v246, %v244
  %249 = vrot.lane.b32.xlu0 %v248, 100
  %v250 = vpop.permute.xlu0 %249
  %vm251 = vcmask 171008
  %s252 = scalar_lea.vmem %s1, 14
  %253 = vst.msk [vmem:[%s252] sm:$0x1] %vm251, %v250
  %vm254 = vcmask 1048352
  %s255 = scalar_lea.vmem %s1, 13
  %256 = vst.msk [vmem:[%s255] sm:$0x1] %vm254, %v250
  %s257 = scalar_lea.vmem %s0, 2
  %v258 = vld [vmem:[%s257] sm:$0x1]
  %s259 = scalar_lea.vmem %s0, 2
  %v260 = vld [vmem:[%s259] sm:$0x1]
  %vm261 = vcmask 244736
  %v262 = vsel %vm261, %v260, %v258
  %263 = vrot.lane.b32.xlu0 %v262, 98
  %v264 = vpop.permute.xlu0 %263
  %vm265 = vcmask 154624
  %s266 = scalar_lea.vmem %s1, 1
  %267 = vst.msk [vmem:[%s266] sm:$0x1] %vm265, %v264
  %vm268 = vcmask 1048336
  %269 = vst.msk [vmem:[%s1] sm:$0x1] %vm268, %v264
  %s270 = scalar_lea.vmem %s0, 49
  %v271 = vld [vmem:[%s270] sm:$0x1]
  %s272 = scalar_lea.vmem %s0, 49
  %v273 = vld [vmem:[%s272] sm:$0x1]
  %vm274 = vcmask 252928
  %v275 = vsel %vm274, %v273, %v271
  %276 = vrot.lane.b32.xlu0 %v275, 97
  %v277 = vpop.permute.xlu0 %276
  %vm278 = vcmask 146432
  %s279 = scalar_lea.vmem %s1, 19
  %280 = vst.msk [vmem:[%s279] sm:$0x1] %vm278, %v277
  %vm281 = vcmask 1048328
  %s282 = scalar_lea.vmem %s1, 18
  %283 = vst.msk [vmem:[%s282] sm:$0x1] %vm281, %v277
  %s284 = scalar_lea.vmem %s0, 15
  %v285 = vld [vmem:[%s284] sm:$0x1]
  %s286 = scalar_lea.vmem %s0, 15
  %v287 = vld [vmem:[%s286] sm:$0x1]
  %vm288 = vcmask 269312
  %v289 = vsel %vm288, %v287, %v285
  %290 = vrot.lane.b32.xlu0 %v289, 95
  %v291 = vpop.permute.xlu0 %290
  %vm292 = vcmask 130048
  %s293 = scalar_lea.vmem %s1, 6
  %294 = vst.msk [vmem:[%s293] sm:$0x1] %vm292, %v291
  %vm295 = vcmask 1048312
  %s296 = scalar_lea.vmem %s1, 5
  %297 = vst.msk [vmem:[%s296] sm:$0x1] %vm295, %v291
  %s298 = scalar_lea.vmem %s0, 62
  %v299 = vld [vmem:[%s298] sm:$0x1]
  %s300 = scalar_lea.vmem %s0, 62
  %v301 = vld [vmem:[%s300] sm:$0x1]
  %vm302 = vcmask 277504
  %v303 = vsel %vm302, %v301, %v299
  %304 = vrot.lane.b32.xlu0 %v303, 94
  %v305 = vpop.permute.xlu0 %304
  %vm306 = vcmask 121856
  %s307 = scalar_lea.vmem %s1, 24
  %308 = vst.msk [vmem:[%s307] sm:$0x1] %vm306, %v305
  %vm309 = vcmask 1048304
  %s310 = scalar_lea.vmem %s1, 23
  %311 = vst.msk [vmem:[%s310] sm:$0x1] %vm309, %v305
  %s312 = scalar_lea.vmem %s0, 28
  %v313 = vld [vmem:[%s312] sm:$0x1]
  %s314 = scalar_lea.vmem %s0, 28
  %v315 = vld [vmem:[%s314] sm:$0x1]
  %vm316 = vcmask 293888
  %v317 = vsel %vm316, %v315, %v313
  %318 = vrot.lane.b32.xlu0 %v317, 92
  %v319 = vpop.permute.xlu0 %318
  %vm320 = vcmask 105472
  %s321 = scalar_lea.vmem %s1, 11
  %322 = vst.msk [vmem:[%s321] sm:$0x1] %vm320, %v319
  %vm323 = vcmask 1048288
  %s324 = scalar_lea.vmem %s1, 10
  %325 = vst.msk [vmem:[%s324] sm:$0x1] %vm323, %v319
  %s326 = scalar_lea.vmem %s0, 75
  %v327 = vld [vmem:[%s326] sm:$0x1]
  %s328 = scalar_lea.vmem %s0, 75
  %v329 = vld [vmem:[%s328] sm:$0x1]
  %vm330 = vcmask 302080
  %v331 = vsel %vm330, %v329, %v327
  %332 = vrot.lane.b32.xlu0 %v331, 91
  %v333 = vpop.permute.xlu0 %332
  %vm334 = vcmask 97280
  %s335 = scalar_lea.vmem %s1, 29
  %336 = vst.msk [vmem:[%s335] sm:$0x1] %vm334, %v333
  %vm337 = vcmask 1048280
  %s338 = scalar_lea.vmem %s1, 28
  %339 = vst.msk [vmem:[%s338] sm:$0x1] %vm337, %v333
  %s340 = scalar_lea.vmem %s0, 41
  %v341 = vld [vmem:[%s340] sm:$0x1]
  %s342 = scalar_lea.vmem %s0, 41
  %v343 = vld [vmem:[%s342] sm:$0x1]
  %vm344 = vcmask 318464
  %v345 = vsel %vm344, %v343, %v341
  %346 = vrot.lane.b32.xlu0 %v345, 89
  %v347 = vpop.permute.xlu0 %346
  %vm348 = vcmask 80896
  %s349 = scalar_lea.vmem %s1, 16
  %350 = vst.msk [vmem:[%s349] sm:$0x1] %vm348, %v347
  %vm351 = vcmask 1048264
  %s352 = scalar_lea.vmem %s1, 15
  %353 = vst.msk [vmem:[%s352] sm:$0x1] %vm351, %v347
  %s354 = scalar_lea.vmem %s0, 7
  %v355 = vld [vmem:[%s354] sm:$0x1]
  %s356 = scalar_lea.vmem %s0, 7
  %v357 = vld [vmem:[%s356] sm:$0x1]
  %vm358 = vcmask 334848
  %v359 = vsel %vm358, %v357, %v355
  %360 = vrot.lane.b32.xlu0 %v359, 87
  %v361 = vpop.permute.xlu0 %360
  %vm362 = vcmask 64512
  %s363 = scalar_lea.vmem %s1, 3
  %364 = vst.msk [vmem:[%s363] sm:$0x1] %vm362, %v361
  %vm365 = vcmask 1048248
  %s366 = scalar_lea.vmem %s1, 2
  %367 = vst.msk [vmem:[%s366] sm:$0x1] %vm365, %v361
  %s368 = scalar_lea.vmem %s0, 54
  %v369 = vld [vmem:[%s368] sm:$0x1]
  %s370 = scalar_lea.vmem %s0, 54
  %v371 = vld [vmem:[%s370] sm:$0x1]
  %vm372 = vcmask 343040
  %v373 = vsel %vm372, %v371, %v369
  %374 = vrot.lane.b32.xlu0 %v373, 86
  %v375 = vpop.permute.xlu0 %374
  %vm376 = vcmask 56320
  %s377 = scalar_lea.vmem %s1, 21
  %378 = vst.msk [vmem:[%s377] sm:$0x1] %vm376, %v375
  %vm379 = vcmask 1048240
  %s380 = scalar_lea.vmem %s1, 20
  %381 = vst.msk [vmem:[%s380] sm:$0x1] %vm379, %v375
  %s382 = scalar_lea.vmem %s0, 20
  %v383 = vld [vmem:[%s382] sm:$0x1]
  %s384 = scalar_lea.vmem %s0, 20
  %v385 = vld [vmem:[%s384] sm:$0x1]
  %vm386 = vcmask 359424
  %v387 = vsel %vm386, %v385, %v383
  %388 = vrot.lane.b32.xlu0 %v387, 84
  %v389 = vpop.permute.xlu0 %388
  %vm390 = vcmask 39936
  %s391 = scalar_lea.vmem %s1, 8
  %392 = vst.msk [vmem:[%s391] sm:$0x1] %vm390, %v389
  %vm393 = vcmask 1048224
  %s394 = scalar_lea.vmem %s1, 7
  %395 = vst.msk [vmem:[%s394] sm:$0x1] %vm393, %v389
  %s396 = scalar_lea.vmem %s0, 67
  %v397 = vld [vmem:[%s396] sm:$0x1]
  %s398 = scalar_lea.vmem %s0, 67
  %v399 = vld [vmem:[%s398] sm:$0x1]
  %vm400 = vcmask 367616
  %v401 = vsel %vm400, %v399, %v397
  %402 = vrot.lane.b32.xlu0 %v401, 83
  %v403 = vpop.permute.xlu0 %402
  %vm404 = vcmask 31744
  %s405 = scalar_lea.vmem %s1, 26
  %406 = vst.msk [vmem:[%s405] sm:$0x1] %vm404, %v403
  %vm407 = vcmask 1048216
  %s408 = scalar_lea.vmem %s1, 25
  %409 = vst.msk [vmem:[%s408] sm:$0x1] %vm407, %v403
  %s410 = scalar_lea.vmem %s0, 33
  %v411 = vld [vmem:[%s410] sm:$0x1]
  %s412 = scalar_lea.vmem %s0, 33
  %v413 = vld [vmem:[%s412] sm:$0x1]
  %vm414 = vcmask 384000
  %v415 = vsel %vm414, %v413, %v411
  %416 = vrot.lane.b32.xlu0 %v415, 81
  %v417 = vpop.permute.xlu0 %416
  %vm418 = vcmask 15360
  %s419 = scalar_lea.vmem %s1, 13
  %420 = vst.msk [vmem:[%s419] sm:$0x1] %vm418, %v417
  %vm421 = vcmask 1048200
  %s422 = scalar_lea.vmem %s1, 12
  %423 = vst.msk [vmem:[%s422] sm:$0x1] %vm421, %v417
  %s424 = scalar_lea.vmem %s0, 80
  %v425 = vld [vmem:[%s424] sm:$0x1]
  %s426 = scalar_lea.vmem %s0, 80
  %v427 = vld [vmem:[%s426] sm:$0x1]
  %vm428 = vcmask 392192
  %v429 = vsel %vm428, %v427, %v425
  %430 = vrot.lane.b32.xlu0 %v429, 80
  %v431 = vpop.permute.xlu0 %430
  %vm432 = vcmask 7168
  %s433 = scalar_lea.vmem %s1, 31
  %434 = vst.msk [vmem:[%s433] sm:$0x1] %vm432, %v431
  %vm435 = vcmask 1048192
  %s436 = scalar_lea.vmem %s1, 30
  %437 = vst.msk [vmem:[%s436] sm:$0x1] %vm435, %v431
  %s438 = scalar_lea.vmem %s0, 46
  %v439 = vld [vmem:[%s438] sm:$0x1]
  %440 = vrot.lane.b32.xlu0 %v439, 78
  %v441 = vpop.permute.xlu0 %440
  %vm442 = vcmask 1039984
  %s443 = scalar_lea.vmem %s1, 17
  %444 = vst.msk [vmem:[%s443] sm:$0x1] %vm442, %v441
  %s445 = scalar_lea.vmem %s0, 12
  %v446 = vld [vmem:[%s445] sm:$0x1]
  %447 = vrot.lane.b32.xlu0 %v446, 76
  %v448 = vpop.permute.xlu0 %447
  %vm449 = vcmask 1023584
  %s450 = scalar_lea.vmem %s1, 4
  %451 = vst.msk [vmem:[%s450] sm:$0x1] %vm449, %v448
  %s452 = scalar_lea.vmem %s0, 59
  %v453 = vld [vmem:[%s452] sm:$0x1]
  %454 = vrot.lane.b32.xlu0 %v453, 75
  %v455 = vpop.permute.xlu0 %454
  %vm456 = vcmask 1015384
  %s457 = scalar_lea.vmem %s1, 22
  %458 = vst.msk [vmem:[%s457] sm:$0x1] %vm456, %v455
  %s459 = scalar_lea.vmem %s0, 25
  %v460 = vld [vmem:[%s459] sm:$0x1]
  %461 = vrot.lane.b32.xlu0 %v460, 73
  %v462 = vpop.permute.xlu0 %461
  %vm463 = vcmask 998984
  %s464 = scalar_lea.vmem %s1, 9
  %465 = vst.msk [vmem:[%s464] sm:$0x1] %vm463, %v462
  %s466 = scalar_lea.vmem %s0, 72
  %v467 = vld [vmem:[%s466] sm:$0x1]
  %468 = vrot.lane.b32.xlu0 %v467, 72
  %v469 = vpop.permute.xlu0 %468
  %vm470 = vcmask 990784
  %s471 = scalar_lea.vmem %s1, 27
  %472 = vst.msk [vmem:[%s471] sm:$0x1] %vm470, %v469
  %s473 = scalar_lea.vmem %s0, 38
  %v474 = vld [vmem:[%s473] sm:$0x1]
  %475 = vrot.lane.b32.xlu0 %v474, 70
  %v476 = vpop.permute.xlu0 %475
  %vm477 = vcmask 974384
  %s478 = scalar_lea.vmem %s1, 14
  %479 = vst.msk [vmem:[%s478] sm:$0x1] %vm477, %v476
  %s480 = scalar_lea.vmem %s0, 4
  %v481 = vld [vmem:[%s480] sm:$0x1]
  %482 = vrot.lane.b32.xlu0 %v481, 68
  %v483 = vpop.permute.xlu0 %482
  %vm484 = vcmask 957984
  %s485 = scalar_lea.vmem %s1, 1
  %486 = vst.msk [vmem:[%s485] sm:$0x1] %vm484, %v483
  %s487 = scalar_lea.vmem %s0, 51
  %v488 = vld [vmem:[%s487] sm:$0x1]
  %489 = vrot.lane.b32.xlu0 %v488, 67
  %v490 = vpop.permute.xlu0 %489
  %vm491 = vcmask 949784
  %s492 = scalar_lea.vmem %s1, 19
  %493 = vst.msk [vmem:[%s492] sm:$0x1] %vm491, %v490
  %s494 = scalar_lea.vmem %s0, 17
  %v495 = vld [vmem:[%s494] sm:$0x1]
  %496 = vrot.lane.b32.xlu0 %v495, 65
  %v497 = vpop.permute.xlu0 %496
  %vm498 = vcmask 933384
  %s499 = scalar_lea.vmem %s1, 6
  %500 = vst.msk [vmem:[%s499] sm:$0x1] %vm498, %v497
  %s501 = scalar_lea.vmem %s0, 64
  %v502 = vld [vmem:[%s501] sm:$0x1]
  %503 = vrot.lane.b32.xlu0 %v502, 64
  %v504 = vpop.permute.xlu0 %503
  %vm505 = vcmask 925184
  %s506 = scalar_lea.vmem %s1, 24
  %507 = vst.msk [vmem:[%s506] sm:$0x1] %vm505, %v504
  %s508 = scalar_lea.vmem %s0, 30
  %v509 = vld [vmem:[%s508] sm:$0x1]
  %510 = vrot.lane.b32.xlu0 %v509, 62
  %v511 = vpop.permute.xlu0 %510
  %vm512 = vcmask 908784
  %s513 = scalar_lea.vmem %s1, 11
  %514 = vst.msk [vmem:[%s513] sm:$0x1] %vm512, %v511
  %s515 = scalar_lea.vmem %s0, 77
  %v516 = vld [vmem:[%s515] sm:$0x1]
  %517 = vrot.lane.b32.xlu0 %v516, 61
  %v518 = vpop.permute.xlu0 %517
  %vm519 = vcmask 900584
  %s520 = scalar_lea.vmem %s1, 29
  %521 = vst.msk [vmem:[%s520] sm:$0x1] %vm519, %v518
  %s522 = scalar_lea.vmem %s0, 43
  %v523 = vld [vmem:[%s522] sm:$0x1]
  %524 = vrot.lane.b32.xlu0 %v523, 59
  %v525 = vpop.permute.xlu0 %524
  %vm526 = vcmask 884184
  %s527 = scalar_lea.vmem %s1, 16
  %528 = vst.msk [vmem:[%s527] sm:$0x1] %vm526, %v525
  %s529 = scalar_lea.vmem %s0, 9
  %v530 = vld [vmem:[%s529] sm:$0x1]
  %531 = vrot.lane.b32.xlu0 %v530, 57
  %v532 = vpop.permute.xlu0 %531
  %vm533 = vcmask 867784
  %s534 = scalar_lea.vmem %s1, 3
  %535 = vst.msk [vmem:[%s534] sm:$0x1] %vm533, %v532
  %s536 = scalar_lea.vmem %s0, 56
  %v537 = vld [vmem:[%s536] sm:$0x1]
  %538 = vrot.lane.b32.xlu0 %v537, 56
  %v539 = vpop.permute.xlu0 %538
  %vm540 = vcmask 859584
  %s541 = scalar_lea.vmem %s1, 21
  %542 = vst.msk [vmem:[%s541] sm:$0x1] %vm540, %v539
  %s543 = scalar_lea.vmem %s0, 22
  %v544 = vld [vmem:[%s543] sm:$0x1]
  %545 = vrot.lane.b32.xlu0 %v544, 54
  %v546 = vpop.permute.xlu0 %545
  %vm547 = vcmask 843184
  %s548 = scalar_lea.vmem %s1, 8
  %549 = vst.msk [vmem:[%s548] sm:$0x1] %vm547, %v546
  %s550 = scalar_lea.vmem %s0, 69
  %v551 = vld [vmem:[%s550] sm:$0x1]
  %552 = vrot.lane.b32.xlu0 %v551, 53
  %v553 = vpop.permute.xlu0 %552
  %vm554 = vcmask 834984
  %s555 = scalar_lea.vmem %s1, 26
  %556 = vst.msk [vmem:[%s555] sm:$0x1] %vm554, %v553
  %s557 = scalar_lea.vmem %s0, 35
  %v558 = vld [vmem:[%s557] sm:$0x1]
  %559 = vrot.lane.b32.xlu0 %v558, 51
  %v560 = vpop.permute.xlu0 %559
  %vm561 = vcmask 818584
  %s562 = scalar_lea.vmem %s1, 13
  %563 = vst.msk [vmem:[%s562] sm:$0x1] %vm561, %v560
  %s564 = scalar_lea.vmem %s0, 1
  %v565 = vld [vmem:[%s564] sm:$0x1]
  %566 = vrot.lane.b32.xlu0 %v565, 49
  %v567 = vpop.permute.xlu0 %566
  %vm568 = vcmask 802184
  %569 = vst.msk [vmem:[%s1] sm:$0x1] %vm568, %v567
  %s570 = scalar_lea.vmem %s0, 48
  %v571 = vld [vmem:[%s570] sm:$0x1]
  %572 = vrot.lane.b32.xlu0 %v571, 48
  %v573 = vpop.permute.xlu0 %572
  %vm574 = vcmask 793984
  %s575 = scalar_lea.vmem %s1, 18
  %576 = vst.msk [vmem:[%s575] sm:$0x1] %vm574, %v573
  %s577 = scalar_lea.vmem %s0, 14
  %v578 = vld [vmem:[%s577] sm:$0x1]
  %579 = vrot.lane.b32.xlu0 %v578, 46
  %v580 = vpop.permute.xlu0 %579
  %vm581 = vcmask 777584
  %s582 = scalar_lea.vmem %s1, 5
  %583 = vst.msk [vmem:[%s582] sm:$0x1] %vm581, %v580
  %s584 = scalar_lea.vmem %s0, 61
  %v585 = vld [vmem:[%s584] sm:$0x1]
  %586 = vrot.lane.b32.xlu0 %v585, 45
  %v587 = vpop.permute.xlu0 %586
  %vm588 = vcmask 769384
  %s589 = scalar_lea.vmem %s1, 23
  %590 = vst.msk [vmem:[%s589] sm:$0x1] %vm588, %v587
  %s591 = scalar_lea.vmem %s0, 27
  %v592 = vld [vmem:[%s591] sm:$0x1]
  %593 = vrot.lane.b32.xlu0 %v592, 43
  %v594 = vpop.permute.xlu0 %593
  %vm595 = vcmask 752984
  %s596 = scalar_lea.vmem %s1, 10
  %597 = vst.msk [vmem:[%s596] sm:$0x1] %vm595, %v594
  %s598 = scalar_lea.vmem %s0, 74
  %v599 = vld [vmem:[%s598] sm:$0x1]
  %600 = vrot.lane.b32.xlu0 %v599, 42
  %v601 = vpop.permute.xlu0 %600
  %vm602 = vcmask 744784
  %s603 = scalar_lea.vmem %s1, 28
  %604 = vst.msk [vmem:[%s603] sm:$0x1] %vm602, %v601
  %s605 = scalar_lea.vmem %s0, 40
  %v606 = vld [vmem:[%s605] sm:$0x1]
  %607 = vrot.lane.b32.xlu0 %v606, 40
  %v608 = vpop.permute.xlu0 %607
  %vm609 = vcmask 728384
  %s610 = scalar_lea.vmem %s1, 15
  %611 = vst.msk [vmem:[%s610] sm:$0x1] %vm609, %v608
  %s612 = scalar_lea.vmem %s0, 6
  %v613 = vld [vmem:[%s612] sm:$0x1]
  %614 = vrot.lane.b32.xlu0 %v613, 38
  %v615 = vpop.permute.xlu0 %614
  %vm616 = vcmask 711984
  %s617 = scalar_lea.vmem %s1, 2
  %618 = vst.msk [vmem:[%s617] sm:$0x1] %vm616, %v615
  %s619 = scalar_lea.vmem %s0, 53
  %v620 = vld [vmem:[%s619] sm:$0x1]
  %621 = vrot.lane.b32.xlu0 %v620, 37
  %v622 = vpop.permute.xlu0 %621
  %vm623 = vcmask 703784
  %s624 = scalar_lea.vmem %s1, 20
  %625 = vst.msk [vmem:[%s624] sm:$0x1] %vm623, %v622
  %s626 = scalar_lea.vmem %s0, 19
  %v627 = vld [vmem:[%s626] sm:$0x1]
  %628 = vrot.lane.b32.xlu0 %v627, 35
  %v629 = vpop.permute.xlu0 %628
  %vm630 = vcmask 687384
  %s631 = scalar_lea.vmem %s1, 7
  %632 = vst.msk [vmem:[%s631] sm:$0x1] %vm630, %v629
  %s633 = scalar_lea.vmem %s0, 66
  %v634 = vld [vmem:[%s633] sm:$0x1]
  %635 = vrot.lane.b32.xlu0 %v634, 34
  %v636 = vpop.permute.xlu0 %635
  %vm637 = vcmask 679184
  %s638 = scalar_lea.vmem %s1, 25
  %639 = vst.msk [vmem:[%s638] sm:$0x1] %vm637, %v636
  %s640 = scalar_lea.vmem %s0, 32
  %v641 = vld [vmem:[%s640] sm:$0x1]
  %642 = vrot.lane.b32.xlu0 %v641, 32
  %v643 = vpop.permute.xlu0 %642
  %vm644 = vcmask 662784
  %s645 = scalar_lea.vmem %s1, 12
  %646 = vst.msk [vmem:[%s645] sm:$0x1] %vm644, %v643
  %s647 = scalar_lea.vmem %s0, 79
  %v648 = vld [vmem:[%s647] sm:$0x1]
  %649 = vrot.lane.b32.xlu0 %v648, 31
  %v650 = vpop.permute.xlu0 %649
  %vm651 = vcmask 654584
  %s652 = scalar_lea.vmem %s1, 30
  %653 = vst.msk [vmem:[%s652] sm:$0x1] %vm651, %v650
  %s654 = scalar_lea.vmem %s0, 45
  %v655 = vld [vmem:[%s654] sm:$0x1]
  %656 = vrot.lane.b32.xlu0 %v655, 29
  %v657 = vpop.permute.xlu0 %656
  %vm658 = vcmask 638184
  %s659 = scalar_lea.vmem %s1, 17
  %660 = vst.msk [vmem:[%s659] sm:$0x1] %vm658, %v657
  %s661 = scalar_lea.vmem %s0, 11
  %v662 = vld [vmem:[%s661] sm:$0x1]
  %663 = vrot.lane.b32.xlu0 %v662, 27
  %v664 = vpop.permute.xlu0 %663
  %vm665 = vcmask 621784
  %s666 = scalar_lea.vmem %s1, 4
  %667 = vst.msk [vmem:[%s666] sm:$0x1] %vm665, %v664
  %s668 = scalar_lea.vmem %s0, 58
  %v669 = vld [vmem:[%s668] sm:$0x1]
  %670 = vrot.lane.b32.xlu0 %v669, 26
  %v671 = vpop.permute.xlu0 %670
  %vm672 = vcmask 613584
  %s673 = scalar_lea.vmem %s1, 22
  %674 = vst.msk [vmem:[%s673] sm:$0x1] %vm672, %v671
  %s675 = scalar_lea.vmem %s0, 24
  %v676 = vld [vmem:[%s675] sm:$0x1]
  %677 = vrot.lane.b32.xlu0 %v676, 24
  %v678 = vpop.permute.xlu0 %677
  %vm679 = vcmask 597184
  %s680 = scalar_lea.vmem %s1, 9
  %681 = vst.msk [vmem:[%s680] sm:$0x1] %vm679, %v678
  %s682 = scalar_lea.vmem %s0, 71
  %v683 = vld [vmem:[%s682] sm:$0x1]
  %684 = vrot.lane.b32.xlu0 %v683, 23
  %v685 = vpop.permute.xlu0 %684
  %vm686 = vcmask 588984
  %s687 = scalar_lea.vmem %s1, 27
  %688 = vst.msk [vmem:[%s687] sm:$0x1] %vm686, %v685
  %s689 = scalar_lea.vmem %s0, 37
  %v690 = vld [vmem:[%s689] sm:$0x1]
  %691 = vrot.lane.b32.xlu0 %v690, 21
  %v692 = vpop.permute.xlu0 %691
  %vm693 = vcmask 572584
  %s694 = scalar_lea.vmem %s1, 14
  %695 = vst.msk [vmem:[%s694] sm:$0x1] %vm693, %v692
  %s696 = scalar_lea.vmem %s0, 3
  %v697 = vld [vmem:[%s696] sm:$0x1]
  %698 = vrot.lane.b32.xlu0 %v697, 19
  %v699 = vpop.permute.xlu0 %698
  %vm700 = vcmask 556184
  %s701 = scalar_lea.vmem %s1, 1
  %702 = vst.msk [vmem:[%s701] sm:$0x1] %vm700, %v699
  %s703 = scalar_lea.vmem %s0, 50
  %v704 = vld [vmem:[%s703] sm:$0x1]
  %705 = vrot.lane.b32.xlu0 %v704, 18
  %v706 = vpop.permute.xlu0 %705
  %vm707 = vcmask 547984
  %s708 = scalar_lea.vmem %s1, 19
  %709 = vst.msk [vmem:[%s708] sm:$0x1] %vm707, %v706
  %s710 = scalar_lea.vmem %s0, 16
  %v711 = vld [vmem:[%s710] sm:$0x1]
  %712 = vrot.lane.b32.xlu0 %v711, 16
  %v713 = vpop.permute.xlu0 %712
  %vm714 = vcmask 531584
  %s715 = scalar_lea.vmem %s1, 6
  %716 = vst.msk [vmem:[%s715] sm:$0x1] %vm714, %v713
  %s717 = scalar_lea.vmem %s0, 63
  %v718 = vld [vmem:[%s717] sm:$0x1]
  %719 = vrot.lane.b32.xlu0 %v718, 15
  %v720 = vpop.permute.xlu0 %719
  %vm721 = vcmask 523384
  %s722 = scalar_lea.vmem %s1, 24
  %723 = vst.msk [vmem:[%s722] sm:$0x1] %vm721, %v720
  %s724 = scalar_lea.vmem %s0, 29
  %v725 = vld [vmem:[%s724] sm:$0x1]
  %726 = vrot.lane.b32.xlu0 %v725, 13
  %v727 = vpop.permute.xlu0 %726
  %vm728 = vcmask 506984
  %s729 = scalar_lea.vmem %s1, 11
  %730 = vst.msk [vmem:[%s729] sm:$0x1] %vm728, %v727
  %s731 = scalar_lea.vmem %s0, 76
  %v732 = vld [vmem:[%s731] sm:$0x1]
  %733 = vrot.lane.b32.xlu0 %v732, 12
  %v734 = vpop.permute.xlu0 %733
  %vm735 = vcmask 498784
  %s736 = scalar_lea.vmem %s1, 29
  %737 = vst.msk [vmem:[%s736] sm:$0x1] %vm735, %v734
  %s738 = scalar_lea.vmem %s0, 42
  %v739 = vld [vmem:[%s738] sm:$0x1]
  %740 = vrot.lane.b32.xlu0 %v739, 10
  %v741 = vpop.permute.xlu0 %740
  %vm742 = vcmask 482384
  %s743 = scalar_lea.vmem %s1, 16
  %744 = vst.msk [vmem:[%s743] sm:$0x1] %vm742, %v741
  %s745 = scalar_lea.vmem %s0, 8
  %v746 = vld [vmem:[%s745] sm:$0x1]
  %747 = vrot.lane.b32.xlu0 %v746, 8
  %v748 = vpop.permute.xlu0 %747
  %vm749 = vcmask 465984
  %s750 = scalar_lea.vmem %s1, 3
  %751 = vst.msk [vmem:[%s750] sm:$0x1] %vm749, %v748
  %s752 = scalar_lea.vmem %s0, 55
  %v753 = vld [vmem:[%s752] sm:$0x1]
  %754 = vrot.lane.b32.xlu0 %v753, 7
  %v755 = vpop.permute.xlu0 %754
  %vm756 = vcmask 457784
  %s757 = scalar_lea.vmem %s1, 21
  %758 = vst.msk [vmem:[%s757] sm:$0x1] %vm756, %v755
  %s759 = scalar_lea.vmem %s0, 21
  %v760 = vld [vmem:[%s759] sm:$0x1]
  %761 = vrot.lane.b32.xlu0 %v760, 5
  %v762 = vpop.permute.xlu0 %761
  %vm763 = vcmask 441384
  %s764 = scalar_lea.vmem %s1, 8
  %765 = vst.msk [vmem:[%s764] sm:$0x1] %vm763, %v762
  %s766 = scalar_lea.vmem %s0, 68
  %v767 = vld [vmem:[%s766] sm:$0x1]
  %768 = vrot.lane.b32.xlu0 %v767, 4
  %v769 = vpop.permute.xlu0 %768
  %vm770 = vcmask 433184
  %s771 = scalar_lea.vmem %s1, 26
  %772 = vst.msk [vmem:[%s771] sm:$0x1] %vm770, %v769
  %s773 = scalar_lea.vmem %s0, 34
  %v774 = vld [vmem:[%s773] sm:$0x1]
  %775 = vrot.lane.b32.xlu0 %v774, 2
  %v776 = vpop.permute.xlu0 %775
  %vm777 = vcmask 416784
  %s778 = scalar_lea.vmem %s1, 13
  %779 = vst.msk [vmem:[%s778] sm:$0x1] %vm777, %v776

</llo_original>
